<compile_context>
chip_gen: v5e
topology: v5e:2x2
jax: 0.10.0
libtpu: 0.0.40
codegen_flags: <defaults>
</compile_context>

<pallas_src>
import functools

import jax
import jax.numpy as jnp
from jax import lax
from jax.experimental import pallas as pl
from jax.experimental.pallas import tpu as pltpu


def _attention_kernel(x_ref, e_ref, wqx_ref, wqe_ref, wkx_ref, wke_ref,
                      *refs, scale, activation, tq, write_attn):
    if write_attn:
        out_ref, attn_ref, q_scr, k_scr = refs
    else:
        out_ref, q_scr, k_scr = refs
        attn_ref = None

    qi = pl.program_id(1)

    @pl.when(qi == 0)
    def _():
        # Per-batch q/k projections, accumulated in f32, stored in the input
        # dtype directly into scratch (no column slicing of a fused result, so
        # no relayout when D % 128 != 0).
        x = x_ref[0]
        e = e_ref[0]
        q = jnp.dot(x, wqx_ref[...], preferred_element_type=jnp.float32)
        q = q + jnp.dot(e, wqe_ref[...], preferred_element_type=jnp.float32)
        k = jnp.dot(x, wkx_ref[...], preferred_element_type=jnp.float32)
        k = k + jnp.dot(e, wke_ref[...], preferred_element_type=jnp.float32)
        q_scr[...] = q.astype(q_scr.dtype)
        k_scr[...] = k.astype(k_scr.dtype)

    row0 = pl.multiple_of(qi * tq, tq)
    q = q_scr[pl.ds(row0, tq), :]          # (TQ, D) in input dtype
    k = k_scr[...]                         # (N, D)  in input dtype

    # logits[n, m] = sum_d q[n, d] * k[m, d] -- contract the minor dims so the
    # MXU consumes k in its native layout (same pattern as flash attention's
    # q @ k^T); no XLU transpose of k.
    logits = lax.dot_general(q, k, (((1,), (1,)), ((), ())),
                             preferred_element_type=jnp.float32)   # (TQ, N)

    if activation == 'softmax':
        m = jnp.max(logits, axis=-1, keepdims=True)
        p = jnp.exp(logits - m)
        denom = jnp.sum(p, axis=-1, keepdims=True)
        # Exact reciprocal: attn is an exposed output and EUP has slack here.
        attn = p * (jnp.float32(scale) / denom)
    elif activation == 'sigmoid':
        attn = jax.nn.sigmoid(logits) * scale
    elif activation == 'tanh':
        attn = jnp.tanh(logits) * scale
    else:  # 'none' -> scale was folded into the query projection in the wrapper
        attn = logits

    # TODO(synk): attn_dropout is a no-op in eval / with dropout=0.0; not implemented.

    x_vals = x_ref[0]                                   # (N, T) values
    x_res = x_ref[0, pl.ds(row0, tq), :]                # (TQ, T) residual
    out = jnp.dot(attn.astype(x_vals.dtype), x_vals,
                  preferred_element_type=jnp.float32) + x_res.astype(jnp.float32)

    out_ref[0] = out.astype(out_ref.dtype)
    if write_attn:
        attn_ref[0] = attn.astype(attn_ref.dtype)


def _vmem_cap_bytes():
    """~85% of physical VMEM per TensorCore (v7x: 64 MiB, v5e/v6e: 128 MiB)."""
    phys = 64 << 20  # conservative fallback (v7x)
    try:
        info = pltpu.get_tpu_info()
        phys = int(getattr(info, "vmem_capacity_bytes", phys))
    except Exception:
        pass
    return int(phys * 0.85)


def _budget_bytes(*, N, T, E, D, tq, x_isz, out_isz, attn_isz, scr_isz, write_attn):
    """Accurate per-step VMEM footprint (no double-counted buffering factors)."""
    # Double-buffered input blocks: x, e, and the four weight panels.
    total = 2 * x_isz * (N * T + N * E + 2 * T * D + 2 * E * D)
    # Double-buffered output blocks.
    total += 2 * tq * T * out_isz
    if write_attn:
        total += 2 * tq * N * attn_isz
    # Single-buffered q/k scratch.
    total += 2 * N * D * scr_isz
    # f32 in-kernel temporaries (logits / exp / attn) + out accumulator.
    total += 3 * tq * N * 4 + tq * max(T, D) * 4
    return total


def _choose_tq(N, fits):
    """Largest query tile dividing N whose footprint fits the VMEM budget."""
    cands = [t for t in (4096, 2048, 1024, 512, 256, 128, 64, 32, 16, 8)
             if t <= N and N % t == 0]
    if N not in cands:
        cands.append(N)          # full-N fallback (also handles small / odd N)
    cands = sorted(set(cands), reverse=True)
    for t in cands:
        if fits(t):
            return t
    return cands[-1]


def netformer_attention(x, e, wq, wk, *, activation='none', tq=None,
                        attn_dtype=None, return_attn=True):
    """x: (B, N, dim_X), e: (B, N, dim_E), wq/wk: (D, D) PyTorch-style (out, in).

    attn_dtype: dtype of the returned attention matrix (default x.dtype). Using
        bf16 halves the dominant B*N*N writeback. return_attn=False skips it.
    Note: for unmasked lane-dense attn stores, N should be a multiple of 128.
    """
    B, N, T = x.shape
    E = e.shape[-1]
    D = T + E
    scale = float(D) ** (-0.5)

    out_dtype = x.dtype
    attn_dt = jnp.dtype(attn_dtype) if attn_dtype is not None else jnp.dtype(x.dtype)
    scr_dt = jnp.dtype(x.dtype)

    # PyTorch nn.Linear (bias=False): y = y_in @ W^T with W shaped (out, in).
    wq_t = wq.T.astype(x.dtype)                     # (D, D)
    wk_t = wk.T.astype(x.dtype)
    if activation == 'none':
        # Fold the 1/sqrt(D) scale into the query projection (linear path only).
        wq_t = wq_t * jnp.asarray(scale, wq_t.dtype)
    wq_x, wq_e = wq_t[:T], wq_t[T:]                 # (T, D), (E, D)
    wk_x, wk_e = wk_t[:T], wk_t[T:]

    cap = _vmem_cap_bytes()
    x_isz = jnp.dtype(x.dtype).itemsize
    budget = functools.partial(
        _budget_bytes, N=N, T=T, E=E, D=D, x_isz=x_isz,
        out_isz=jnp.dtype(out_dtype).itemsize, attn_isz=attn_dt.itemsize,
        scr_isz=scr_dt.itemsize, write_attn=return_attn)
    if tq is None:
        tq = _choose_tq(N, lambda t: budget(tq=t) * 1.2 <= cap)
    assert N % tq == 0, "query tile must divide N"
    n_q_tiles = N // tq

    vmem_limit = int(min(max(int(budget(tq=tq) * 1.2), 16 << 20), cap))

    kernel = functools.partial(_attention_kernel, scale=scale,
                               activation=activation, tq=tq,
                               write_attn=return_attn)

    out_shapes = [jax.ShapeDtypeStruct((B, N, T), out_dtype)]
    out_specs = [pl.BlockSpec((1, tq, T), lambda b, q: (b, q, 0))]
    if return_attn:
        out_shapes.append(jax.ShapeDtypeStruct((B, N, N), attn_dt))
        out_specs.append(pl.BlockSpec((1, tq, N), lambda b, q: (b, q, 0)))

    # TODO(synk): for B < num_cores on v7x, hoisting the q/k projection out of
    # the grid would let the qi axis shard across TensorCores; with the scratch
    # dependency it must stay "arbitrary".
    results = pl.pallas_call(
        kernel,
        out_shape=tuple(out_shapes),
        grid_spec=pltpu.PrefetchScalarGridSpec(
            num_scalar_prefetch=0,
            grid=(B, n_q_tiles),
            in_specs=[
                pl.BlockSpec((1, N, T), lambda b, q: (b, 0, 0)),   # x (keys/values)
                pl.BlockSpec((1, N, E), lambda b, q: (b, 0, 0)),   # e
                pl.BlockSpec((T, D), lambda b, q: (0, 0)),         # Wq_x^T
                pl.BlockSpec((E, D), lambda b, q: (0, 0)),         # Wq_e^T
                pl.BlockSpec((T, D), lambda b, q: (0, 0)),         # Wk_x^T
                pl.BlockSpec((E, D), lambda b, q: (0, 0)),         # Wk_e^T
            ],
            out_specs=out_specs,
            scratch_shapes=[
                pltpu.VMEM((N, D), scr_dt),   # q for all rows of this batch
                pltpu.VMEM((N, D), scr_dt),   # k for all rows of this batch
            ],
        ),
        compiler_params=pltpu.CompilerParams(
            dimension_semantics=("parallel", "arbitrary"),
            vmem_limit_bytes=vmem_limit),
    )(x, e, wq_x, wq_e, wk_x, wk_e)

    if return_attn:
        out, attn = results
        return out, attn
    out = results[0] if isinstance(results, (tuple, list)) else results
    return out


def _reference(x, e, wq, wk, activation='none'):
    """Pure-JAX reference mirroring the PyTorch forward."""
    D = x.shape[-1] + e.shape[-1]
    scale = float(D) ** (-0.5)
    x_e = jnp.concatenate([x, e], axis=-1)
    q = jnp.einsum('bnd,od->bno', x_e, wq)
    k = jnp.einsum('bnd,od->bno', x_e, wk)
    logits = jnp.einsum('bnd,bmd->bnm', q, k)
    if activation == 'softmax':
        attn = jax.nn.softmax(logits, axis=-1)
    elif activation == 'sigmoid':
        attn = jax.nn.sigmoid(logits)
    elif activation == 'tanh':
        attn = jnp.tanh(logits)
    else:
        attn = logits
    attn = attn * scale
    out = jnp.einsum('bnm,bmt->bnt', attn, x) + x
    return out, attn


if __name__ == "__main__":
    B, N, dim_X, dim_E = 2, 8, 16, 16
    D = dim_X + dim_E

    key = jax.random.PRNGKey(0)
    kx, ke, kq, kk = jax.random.split(key, 4)
    x = jax.random.normal(kx, (B, N, dim_X), dtype=jnp.float32)
    e = jax.random.normal(ke, (B, N, dim_E), dtype=jnp.float32)
    # Deterministic Linear weights, PyTorch convention (out_features, in_features).
    bound = 1.0 / (D ** 0.5)
    wq = jax.random.uniform(kq, (D, D), jnp.float32, -bound, bound)
    wk = jax.random.uniform(kk, (D, D), jnp.float32, -bound, bound)

    # activation='none' (strict check, matches the module default).
    out, attn = netformer_attention(x, e, wq, wk, activation='none')
    out = jax.block_until_ready(out)
    attn = jax.block_until_ready(attn)
    out_ref, attn_ref = _reference(x, e, wq, wk, activation='none')
    assert jnp.allclose(out, out_ref, atol=1e-4, rtol=1e-4), "out mismatch (none)"
    assert jnp.allclose(attn, attn_ref, atol=1e-4, rtol=1e-4), "attn mismatch (none)"

    # activation='softmax' (exact reciprocal now -> tight tolerance).
    out_s, attn_s = netformer_attention(x, e, wq, wk, activation='softmax')
    out_s = jax.block_until_ready(out_s)
    attn_s = jax.block_until_ready(attn_s)
    out_ref_s, attn_ref_s = _reference(x, e, wq, wk, activation='softmax')
    assert jnp.allclose(out_s, out_ref_s, atol=1e-3, rtol=1e-3), "out mismatch (softmax)"
    assert jnp.allclose(attn_s, attn_ref_s, atol=1e-3, rtol=1e-3), "attn mismatch (softmax)"

    # return_attn=False path (skips the dominant B*N*N writeback entirely).
    out_only = netformer_attention(x, e, wq, wk, activation='none', return_attn=False)
    out_only = jax.block_until_ready(out_only)
    assert jnp.allclose(out_only, out_ref, atol=1e-4, rtol=1e-4), "out mismatch (no-attn)"

    print("KERNEL_OK")
</pallas_src>

<mosaic_0001>
module attributes {stable_mosaic.version = 11 : i64} {
  func.func @_attention_kernel(%arg0: i32, %arg1: i32, %arg2: memref<1x8x16xf32, #tpu.memory_space<vmem>>, %arg3: memref<1x8x16xf32, #tpu.memory_space<vmem>>, %arg4: memref<16x32xf32, #tpu.memory_space<vmem>>, %arg5: memref<16x32xf32, #tpu.memory_space<vmem>>, %arg6: memref<16x32xf32, #tpu.memory_space<vmem>>, %arg7: memref<16x32xf32, #tpu.memory_space<vmem>>, %arg8: memref<1x8x16xf32, #tpu.memory_space<vmem>>, %arg9: memref<1x8x8xf32, #tpu.memory_space<vmem>>, %arg10: memref<8x32xf32, #tpu.memory_space<vmem>>, %arg11: memref<8x32xf32, #tpu.memory_space<vmem>>) attributes {dimension_semantics = [#tpu.dimension_semantics<parallel>, #tpu.dimension_semantics<arbitrary>], iteration_bounds = array<i64: 2, 1>, scalar_prefetch = 0 : i64, scratch_operands = 2 : i64, tpu.core_type = #tpu.core_type<tc>, window_params = [{transform_indices = @transform_0, window_bounds = array<i64: 1, 8, 16>}, {transform_indices = @transform_1, window_bounds = array<i64: 1, 8, 16>}, {pipeline_mode = #tpu.pipeline_mode<synchronous>, transform_indices = @transform_2, window_bounds = array<i64: 16, 32>}, {pipeline_mode = #tpu.pipeline_mode<synchronous>, transform_indices = @transform_3, window_bounds = array<i64: 16, 32>}, {pipeline_mode = #tpu.pipeline_mode<synchronous>, transform_indices = @transform_4, window_bounds = array<i64: 16, 32>}, {pipeline_mode = #tpu.pipeline_mode<synchronous>, transform_indices = @transform_5, window_bounds = array<i64: 16, 32>}, {transform_indices = @transform_6, window_bounds = array<i64: 1, 8, 16>}, {transform_indices = @transform_7, window_bounds = array<i64: 1, 8, 8>}]} {
    %c0_i32 = arith.constant 0 : i32
    %0 = arith.cmpi eq, %arg1, %c0_i32 : i32
    %1 = arith.extui %0 : i1 to i32
    %c0_i32_0 = arith.constant 0 : i32
    %2 = arith.cmpi ne, %1, %c0_i32_0 : i32
    scf.if %2 {
      %c0_15 = arith.constant 0 : index
      %c0_16 = arith.constant 0 : index
      %c0_17 = arith.constant 0 : index
      %22 = vector.load %arg2[%c0_15, %c0_16, %c0_17] : memref<1x8x16xf32, #tpu.memory_space<vmem>>, vector<1x8x16xf32>
      %23 = vector.shape_cast %22 : vector<1x8x16xf32> to vector<8x16xf32>
      %c0_18 = arith.constant 0 : index
      %c0_19 = arith.constant 0 : index
      %c0_20 = arith.constant 0 : index
      %24 = vector.load %arg3[%c0_18, %c0_19, %c0_20] : memref<1x8x16xf32, #tpu.memory_space<vmem>>, vector<1x8x16xf32>
      %25 = vector.shape_cast %24 : vector<1x8x16xf32> to vector<8x16xf32>
      %c0_21 = arith.constant 0 : index
      %c0_22 = arith.constant 0 : index
      %26 = vector.load %arg4[%c0_21, %c0_22] : memref<16x32xf32, #tpu.memory_space<vmem>>, vector<16x32xf32>
      %cst_23 = arith.constant dense<0.000000e+00> : vector<8x32xf32>
      %27 = tpu.matmul %23, %26, %cst_23 {dimension_numbers = #tpu.dot_dimension_numbers<[1], [0], [0], [1], [0, 0, 1, 1], [], []>} : vector<8x16xf32>, vector<16x32xf32>, vector<8x32xf32> -> vector<8x32xf32>
      %c0_24 = arith.constant 0 : index
      %c0_25 = arith.constant 0 : index
      %28 = vector.load %arg5[%c0_24, %c0_25] : memref<16x32xf32, #tpu.memory_space<vmem>>, vector<16x32xf32>
      %cst_26 = arith.constant dense<0.000000e+00> : vector<8x32xf32>
      %29 = tpu.matmul %25, %28, %cst_26 {dimension_numbers = #tpu.dot_dimension_numbers<[1], [0], [0], [1], [0, 0, 1, 1], [], []>} : vector<8x16xf32>, vector<16x32xf32>, vector<8x32xf32> -> vector<8x32xf32>
      %30 = arith.addf %27, %29 : vector<8x32xf32>
      %c0_27 = arith.constant 0 : index
      %c0_28 = arith.constant 0 : index
      %31 = vector.load %arg6[%c0_27, %c0_28] : memref<16x32xf32, #tpu.memory_space<vmem>>, vector<16x32xf32>
      %cst_29 = arith.constant dense<0.000000e+00> : vector<8x32xf32>
      %32 = tpu.matmul %23, %31, %cst_29 {dimension_numbers = #tpu.dot_dimension_numbers<[1], [0], [0], [1], [0, 0, 1, 1], [], []>} : vector<8x16xf32>, vector<16x32xf32>, vector<8x32xf32> -> vector<8x32xf32>
      %c0_30 = arith.constant 0 : index
      %c0_31 = arith.constant 0 : index
      %33 = vector.load %arg7[%c0_30, %c0_31] : memref<16x32xf32, #tpu.memory_space<vmem>>, vector<16x32xf32>
      %cst_32 = arith.constant dense<0.000000e+00> : vector<8x32xf32>
      %34 = tpu.matmul %25, %33, %cst_32 {dimension_numbers = #tpu.dot_dimension_numbers<[1], [0], [0], [1], [0, 0, 1, 1], [], []>} : vector<8x16xf32>, vector<16x32xf32>, vector<8x32xf32> -> vector<8x32xf32>
      %35 = arith.addf %32, %34 : vector<8x32xf32>
      %c0_33 = arith.constant 0 : index
      %c0_34 = arith.constant 0 : index
      %36 = vector.load %arg10[%c0_33, %c0_34] : memref<8x32xf32, #tpu.memory_space<vmem>>, vector<8x32xf32>
      tpu.vector_store %arg10[%c0_33, %c0_34], %30 {strides = array<i32>} : memref<8x32xf32, #tpu.memory_space<vmem>>, vector<8x32xf32>,
      %c0_35 = arith.constant 0 : index
      %c0_36 = arith.constant 0 : index
      %37 = vector.load %arg11[%c0_35, %c0_36] : memref<8x32xf32, #tpu.memory_space<vmem>>, vector<8x32xf32>
      tpu.vector_store %arg11[%c0_35, %c0_36], %35 {strides = array<i32>} : memref<8x32xf32, #tpu.memory_space<vmem>>, vector<8x32xf32>,
    } else {
    }
    %c8_i32 = arith.constant 8 : i32
    %3 = arith.muli %arg1, %c8_i32 : i32
    %4 = tpu.assume_multiple %3, 8 : i32
    %5 = arith.index_cast %4 : i32 to index
    %c0 = arith.constant 0 : index
    %6 = vector.load %arg10[%5, %c0] : memref<8x32xf32, #tpu.memory_space<vmem>>, vector<8x32xf32>
    %c0_1 = arith.constant 0 : index
    %c0_2 = arith.constant 0 : index
    %7 = vector.load %arg11[%c0_1, %c0_2] : memref<8x32xf32, #tpu.memory_space<vmem>>, vector<8x32xf32>
    %cst = arith.constant dense<0.000000e+00> : vector<8x8xf32>
    %8 = tpu.matmul %6, %7, %cst {dimension_numbers = #tpu.dot_dimension_numbers<[1], [1], [0], [0], [0, 0, 1, 0], [], []>} : vector<8x32xf32>, vector<8x32xf32>, vector<8x8xf32> -> vector<8x8xf32>
    %c0_3 = arith.constant 0 : index
    %c0_4 = arith.constant 0 : index
    %c0_5 = arith.constant 0 : index
    %9 = vector.load %arg2[%c0_3, %c0_4, %c0_5] : memref<1x8x16xf32, #tpu.memory_space<vmem>>, vector<1x8x16xf32>
    %10 = vector.shape_cast %9 : vector<1x8x16xf32> to vector<8x16xf32>
    %c0_6 = arith.constant 0 : index
    %11 = arith.index_cast %4 : i32 to index
    %c0_7 = arith.constant 0 : index
    %12 = vector.load %arg2[%c0_6, %11, %c0_7] : memref<1x8x16xf32, #tpu.memory_space<vmem>>, vector<1x8x16xf32>
    %13 = vector.shape_cast %12 : vector<1x8x16xf32> to vector<8x16xf32>
    %cst_8 = arith.constant dense<0.000000e+00> : vector<8x16xf32>
    %14 = tpu.matmul %8, %10, %cst_8 {dimension_numbers = #tpu.dot_dimension_numbers<[1], [0], [0], [1], [0, 0, 1, 1], [], []>} : vector<8x8xf32>, vector<8x16xf32>, vector<8x16xf32> -> vector<8x16xf32>
    %15 = arith.addf %14, %13 : vector<8x16xf32>
    %c0_9 = arith.constant 0 : index
    %c0_10 = arith.constant 0 : index
    %c0_11 = arith.constant 0 : index
    %16 = vector.load %arg8[%c0_9, %c0_10, %c0_11] : memref<1x8x16xf32, #tpu.memory_space<vmem>>, vector<1x8x16xf32>
    %17 = vector.shape_cast %16 : vector<1x8x16xf32> to vector<8x16xf32>
    %18 = vector.shape_cast %15 : vector<8x16xf32> to vector<1x8x16xf32>
    tpu.vector_store %arg8[%c0_9, %c0_10, %c0_11], %18 {strides = array<i32>} : memref<1x8x16xf32, #tpu.memory_space<vmem>>, vector<1x8x16xf32>,
    %c0_12 = arith.constant 0 : index
    %c0_13 = arith.constant 0 : index
    %c0_14 = arith.constant 0 : index
    %19 = vector.load %arg9[%c0_12, %c0_13, %c0_14] : memref<1x8x8xf32, #tpu.memory_space<vmem>>, vector<1x8x8xf32>
    %20 = vector.shape_cast %19 : vector<1x8x8xf32> to vector<8x8xf32>
    %21 = vector.shape_cast %8 : vector<8x8xf32> to vector<1x8x8xf32>
    tpu.vector_store %arg9[%c0_12, %c0_13, %c0_14], %21 {strides = array<i32>} : memref<1x8x8xf32, #tpu.memory_space<vmem>>, vector<1x8x8xf32>,
    return
  }
  func.func @transform_0(%arg0: i32, %arg1: i32) -> (i32, i32, i32) {
    %c0_i32 = arith.constant 0 : i32
    %c0_i32_0 = arith.constant 0 : i32
    %c0_i32_1 = arith.constant 0 : i32
    return %arg0, %c0_i32, %c0_i32_0 : i32, i32, i32
  }
  func.func @transform_1(%arg0: i32, %arg1: i32) -> (i32, i32, i32) {
    %c0_i32 = arith.constant 0 : i32
    %c0_i32_0 = arith.constant 0 : i32
    %c0_i32_1 = arith.constant 0 : i32
    return %arg0, %c0_i32, %c0_i32_0 : i32, i32, i32
  }
  func.func @transform_2(%arg0: i32, %arg1: i32) -> (i32, i32) {
    %c0_i32 = arith.constant 0 : i32
    %c0_i32_0 = arith.constant 0 : i32
    %c0_i32_1 = arith.constant 0 : i32
    return %c0_i32, %c0_i32_0 : i32, i32
  }
  func.func @transform_3(%arg0: i32, %arg1: i32) -> (i32, i32) {
    %c0_i32 = arith.constant 0 : i32
    %c0_i32_0 = arith.constant 0 : i32
    %c0_i32_1 = arith.constant 0 : i32
    return %c0_i32, %c0_i32_0 : i32, i32
  }
  func.func @transform_4(%arg0: i32, %arg1: i32) -> (i32, i32) {
    %c0_i32 = arith.constant 0 : i32
    %c0_i32_0 = arith.constant 0 : i32
    %c0_i32_1 = arith.constant 0 : i32
    return %c0_i32, %c0_i32_0 : i32, i32
  }
  func.func @transform_5(%arg0: i32, %arg1: i32) -> (i32, i32) {
    %c0_i32 = arith.constant 0 : i32
    %c0_i32_0 = arith.constant 0 : i32
    %c0_i32_1 = arith.constant 0 : i32
    return %c0_i32, %c0_i32_0 : i32, i32
  }
  func.func @transform_6(%arg0: i32, %arg1: i32) -> (i32, i32, i32) {
    %c0_i32 = arith.constant 0 : i32
    %c0_i32_0 = arith.constant 0 : i32
    return %arg0, %arg1, %c0_i32 : i32, i32, i32
  }
  func.func @transform_7(%arg0: i32, %arg1: i32) -> (i32, i32, i32) {
    %c0_i32 = arith.constant 0 : i32
    %c0_i32_0 = arith.constant 0 : i32
    return %arg0, %arg1, %c0_i32 : i32, i32, i32
  }
}

</mosaic_0001>

<llo_original>
// kernel: tpu_custom_call.1
$region0: #{tpu_custom_call.1}
  #allocation0 [shape = 'u32[]', space=smem, size = 0x4, offset = 0x4, fixed_abs, tag = 'smem constant byte address 0x4 - core index']
  #allocation1 [shape = 'u32[72,128]{1,0:T(1,128)}', space=vmem, size = 0x9000, scoped, tag = 'internal scratch']
  #allocation2 [shape = 'f32[8,32]{1,0:T(8,128)}', space=vmem, size = 0x1000, scoped, tag = 'scratch operand']
  #allocation3 [shape = 'f32[8,32]{1,0:T(8,128)}', space=vmem, size = 0x1000, scoped, tag = 'scratch operand']
  %s0 = inlined_call_operand.hbm [shape: f32[2,8,16], index: 0, kind: input, shape index: {}]
  %s1 = inlined_call_operand.hbm [shape: f32[2,8,16], index: 1, kind: input, shape index: {}]
  %s2 = inlined_call_operand.hbm [shape: f32[16,32], index: 2, kind: input, shape index: {}]
  %s3 = inlined_call_operand.hbm [shape: f32[16,32], index: 3, kind: input, shape index: {}]
  %s4 = inlined_call_operand.hbm [shape: f32[16,32], index: 4, kind: input, shape index: {}]
  %s5 = inlined_call_operand.hbm [shape: f32[16,32], index: 5, kind: input, shape index: {}]
  %s6 = inlined_call_operand.hbm [shape: f32[2,8,16], index: 6, kind: output, shape index: {0}]
  %s7 = inlined_call_operand.hbm [shape: f32[2,8,8], index: 7, kind: output, shape index: {1}]
  %8 = xla_tuple %s6, %s7
  %s9 = sld [smem:[#allocation0]]
  $region93: #{tpu_custom_call.1} parent=0
    _
  %s11 = ssub.s32 1, %s9
  %s12 = scalar_select 0, %s11, %s9
  $region1: #{tpu_custom_call.1} parent=0
    #allocation4 [shape = 'u8[8192]{0}', space=vmem, size = 0x2000, scoped, tag = 'input window, operand 0']
    #allocation5 [shape = 's32[2]{0}', space=sflag, size = 0x8, scoped, tag = 'scoped memory for tpu_custom_call.1']
    #allocation6 [shape = 's32[2]{0}', space=sflag, size = 0x8, scoped, tag = 'scoped memory for tpu_custom_call.1']
    #allocation7 [shape = 'u8[8192]{0}', space=vmem, size = 0x2000, scoped, tag = 'input window, operand 1']
    #allocation8 [shape = 's32[2]{0}', space=sflag, size = 0x8, scoped, tag = 'scoped memory for tpu_custom_call.1']
    #allocation9 [shape = 'u8[8192]{0}', space=vmem, size = 0x2000, scoped, tag = 'input window, operand 2, single buffered']
    #allocation10 [shape = 'u8[8192]{0}', space=vmem, size = 0x2000, scoped, tag = 'input window, operand 3, single buffered']
    #allocation11 [shape = 's32[1]{0}', space=sflag, size = 0x4, scoped, tag = 'scoped memory for tpu_custom_call.1']
    #allocation12 [shape = 'u8[8192]{0}', space=vmem, size = 0x2000, scoped, tag = 'input window, operand 4, single buffered']
    #allocation13 [shape = 'u8[8192]{0}', space=vmem, size = 0x2000, scoped, tag = 'input window, operand 5, single buffered']
    #allocation14 [shape = 's32[1]{0}', space=sflag, size = 0x4, scoped, tag = 'scoped memory for tpu_custom_call.1']
    #allocation15 [shape = 'u8[8192]{0}', space=vmem, size = 0x2000, scoped, tag = 'output window, operand 0']
    #allocation16 [shape = 'u8[8192]{0}', space=vmem, size = 0x2000, scoped, tag = 'output window, operand 1']
    #allocation17 [shape = 's32[2]{0}', space=sflag, size = 0x8, scoped, tag = 'scoped memory for tpu_custom_call.1']
    %13 = vsyncpa [#allocation5], 0
    %s14 = scalar_lea.sflag [#allocation5], 1
    %15 = vsyncpa %s14, 0
    %16 = vsyncpa [#allocation8], 0
    %s17 = scalar_lea.sflag [#allocation8], 1
    %18 = vsyncpa %s17, 0
    %19 = vsyncpa [#allocation11], 0
    %20 = vsyncpa [#allocation14], 0
    %21 = vsyncpa [#allocation6], 0
    %s22 = scalar_lea.sflag [#allocation6], 1
    %23 = vsyncpa %s22, 0
    %24 = vsyncpa [#allocation17], 0
    %s25 = scalar_lea.sflag [#allocation17], 1
    %26 = vsyncpa %s25, 0
    loop: start=0, step=1, limit=4
    $region2: #{tpu_custom_call.1} parent=1 // loop_pre_header
      _
    $region3: #{tpu_custom_call.1} parent=1 // loop_header
      %s28 = sphi 0, %s32
      %p29 = scmp.ge.s32.totalorder %s28, 4
      %s35 = sphi 0, %s47
      %s36 = sphi 0, %s43
      %s37 = sphi 0, %s35
      %s38 = sphi 0, %s36
      %s39 = sphi 0, %s37
      %s40 = sphi 0, %s38
      %s50 = sphi 0, %s52
      %s53 = sphi 0, %s50
      %s54 = sphi 0, %s53
      %s70 = sphi 0, %s54
      %s76 = sphi 0, %s78
      %s79 = sphi 0, %s76
      %s80 = sphi 0, %s79
      %s96 = sphi 0, %s80
      %s100 = sphi 0, %s100
      %s102 = sphi 0, %s100
      %s103 = sphi 0, %s102
      %s117 = sphi 0, %s103
      %s121 = sphi 0, %s121
      %s123 = sphi 0, %s121
      %s124 = sphi 0, %s123
      %s138 = sphi 0, %s124
      %s142 = sphi 0, %s142
      %s144 = sphi 0, %s142
      %s145 = sphi 0, %s144
      %s159 = sphi 0, %s145
      %s163 = sphi 0, %s163
      %s165 = sphi 0, %s163
      %s166 = sphi 0, %s165
      %s180 = sphi 0, %s166
      %s188 = sphi 0, %s190
      %s191 = sphi 0, %s188
      %s192 = sphi 0, %s191
      %s208 = sphi 0, %s192
      %s216 = sphi 0, %s218
      %s219 = sphi 0, %s216
      %s220 = sphi 0, %s219
      %s236 = sphi 0, %s220
    $region4: #{tpu_custom_call.1} parent=1 // loop_header_branch
      %31 = sbr.rel (%p29) target = $region8
    $region5: #{tpu_custom_call.1} parent=1 // loop_body
      %s33 = ssub.s32 %s28, 1
      %s34 = ssub.s32 %s28, 2
      %s41 = sadd.s32 1, %s36
      %p42 = scmp.ge.s32.totalorder %s41, 1
      %s43 = scalar_select %p42, 0, %s41
      %s44 = sadd.s32 1, %s35
      %s45 = scalar_select %p42, %s44, %s35
      %p46 = scmp.ge.s32.totalorder %s45, 2
      %s47 = scalar_select %p46, 0, %s45
      %s48 = ssub.s32 %s35, %s47
      %p49 = scmp.eq.s32.totalorder %s48, 0
      %s51 = sadd.s32 %s50, 1
      %s52 = scalar_select %p49, %s50, %s51
      %p55 = pneg %p49
      %p56 = scmp.eq.s32.totalorder %s28, 1
      %p57 = por %p55, %p56
      %p58 = scmp.ne.s32.totalorder %s50, %s53
      %p59 = scmp.eq.s32.totalorder %s28, 0
      %p60 = por %p58, %p59
      %p61 = scmp.ne.s32.totalorder %s50, %s53
      %p62 = scmp.eq.s32.totalorder %s33, 1
      %p63 = por %p61, %p62
      %p64 = scmp.ne.s32.totalorder %s53, %s54
      %p65 = scmp.eq.s32.totalorder %s33, 0
      %p66 = por %p64, %p65
      %p67 = scmp.ne.s32.totalorder %s53, %s54
      %p68 = scmp.eq.s32.totalorder %s34, 1
      %p69 = por %p67, %p68
      %p71 = scmp.ne.s32.totalorder %s54, %s70
      %p72 = scmp.eq.s32.totalorder %s34, 0
      %p73 = por %p71, %p72
      %s74 = ssub.s32 %s35, %s47
      %p75 = scmp.eq.s32.totalorder %s74, 0
      %s77 = sadd.s32 %s76, 1
      %s78 = scalar_select %p75, %s76, %s77
      %p81 = pneg %p75
      %p82 = scmp.eq.s32.totalorder %s28, 1
      %p83 = por %p81, %p82
      %p84 = scmp.ne.s32.totalorder %s76, %s79
      %p85 = scmp.eq.s32.totalorder %s28, 0
      %p86 = por %p84, %p85
      %p87 = scmp.ne.s32.totalorder %s76, %s79
      %p88 = scmp.eq.s32.totalorder %s33, 1
      %p89 = por %p87, %p88
      %p90 = scmp.ne.s32.totalorder %s79, %s80
      %p91 = scmp.eq.s32.totalorder %s33, 0
      %p92 = por %p90, %p91
      %p93 = scmp.ne.s32.totalorder %s79, %s80
      %p94 = scmp.eq.s32.totalorder %s34, 1
      %p95 = por %p93, %p94
      %p97 = scmp.ne.s32.totalorder %s80, %s96
      %p98 = scmp.eq.s32.totalorder %s34, 0
      %p99 = por %p97, %p98
      %s101 = sadd.s32 %s100, 1
      %p104 = scmp.eq.s32.totalorder %s28, 1
      %p105 = scmp.ne.s32.totalorder %s100, %s102
      %p106 = scmp.eq.s32.totalorder %s28, 0
      %p107 = por %p105, %p106
      %p108 = scmp.ne.s32.totalorder %s100, %s102
      %p109 = scmp.eq.s32.totalorder %s33, 1
      %p110 = por %p108, %p109
      %p111 = scmp.ne.s32.totalorder %s102, %s103
      %p112 = scmp.eq.s32.totalorder %s33, 0
      %p113 = por %p111, %p112
      %p114 = scmp.ne.s32.totalorder %s102, %s103
      %p115 = scmp.eq.s32.totalorder %s34, 1
      %p116 = por %p114, %p115
      %p118 = scmp.ne.s32.totalorder %s103, %s117
      %p119 = scmp.eq.s32.totalorder %s34, 0
      %p120 = por %p118, %p119
      %s122 = sadd.s32 %s121, 1
      %p125 = scmp.eq.s32.totalorder %s28, 1
      %p126 = scmp.ne.s32.totalorder %s121, %s123
      %p127 = scmp.eq.s32.totalorder %s28, 0
      %p128 = por %p126, %p127
      %p129 = scmp.ne.s32.totalorder %s121, %s123
      %p130 = scmp.eq.s32.totalorder %s33, 1
      %p131 = por %p129, %p130
      %p132 = scmp.ne.s32.totalorder %s123, %s124
      %p133 = scmp.eq.s32.totalorder %s33, 0
      %p134 = por %p132, %p133
      %p135 = scmp.ne.s32.totalorder %s123, %s124
      %p136 = scmp.eq.s32.totalorder %s34, 1
      %p137 = por %p135, %p136
      %p139 = scmp.ne.s32.totalorder %s124, %s138
      %p140 = scmp.eq.s32.totalorder %s34, 0
      %p141 = por %p139, %p140
      %s143 = sadd.s32 %s142, 1
      %p146 = scmp.eq.s32.totalorder %s28, 1
      %p147 = scmp.ne.s32.totalorder %s142, %s144
      %p148 = scmp.eq.s32.totalorder %s28, 0
      %p149 = por %p147, %p148
      %p150 = scmp.ne.s32.totalorder %s142, %s144
      %p151 = scmp.eq.s32.totalorder %s33, 1
      %p152 = por %p150, %p151
      %p153 = scmp.ne.s32.totalorder %s144, %s145
      %p154 = scmp.eq.s32.totalorder %s33, 0
      %p155 = por %p153, %p154
      %p156 = scmp.ne.s32.totalorder %s144, %s145
      %p157 = scmp.eq.s32.totalorder %s34, 1
      %p158 = por %p156, %p157
      %p160 = scmp.ne.s32.totalorder %s145, %s159
      %p161 = scmp.eq.s32.totalorder %s34, 0
      %p162 = por %p160, %p161
      %s164 = sadd.s32 %s163, 1
      %p167 = scmp.eq.s32.totalorder %s28, 1
      %p168 = scmp.ne.s32.totalorder %s163, %s165
      %p169 = scmp.eq.s32.totalorder %s28, 0
      %p170 = por %p168, %p169
      %p171 = scmp.ne.s32.totalorder %s163, %s165
      %p172 = scmp.eq.s32.totalorder %s33, 1
      %p173 = por %p171, %p172
      %p174 = scmp.ne.s32.totalorder %s165, %s166
      %p175 = scmp.eq.s32.totalorder %s33, 0
      %p176 = por %p174, %p175
      %p177 = scmp.ne.s32.totalorder %s165, %s166
      %p178 = scmp.eq.s32.totalorder %s34, 1
      %p179 = por %p177, %p178
      %p181 = scmp.ne.s32.totalorder %s166, %s180
      %p182 = scmp.eq.s32.totalorder %s34, 0
      %p183 = por %p181, %p182
      %s184 = ssub.s32 %s35, %s47
      %s185 = ssub.s32 %s36, %s43
      %s186 = sor.u32 %s184, %s185
      %p187 = scmp.eq.s32.totalorder %s186, 0
      %s189 = sadd.s32 %s188, 1
      %s190 = scalar_select %p187, %s188, %s189
      %p193 = pneg %p187
      %p194 = scmp.eq.s32.totalorder %s28, 1
      %p195 = por %p193, %p194
      %p196 = scmp.ne.s32.totalorder %s188, %s191
      %p197 = scmp.eq.s32.totalorder %s28, 0
      %p198 = por %p196, %p197
      %p199 = scmp.ne.s32.totalorder %s188, %s191
      %p200 = scmp.eq.s32.totalorder %s33, 1
      %p201 = por %p199, %p200
      %p202 = scmp.ne.s32.totalorder %s191, %s192
      %p203 = scmp.eq.s32.totalorder %s33, 0
      %p204 = por %p202, %p203
      %p205 = scmp.ne.s32.totalorder %s191, %s192
      %p206 = scmp.eq.s32.totalorder %s34, 1
      %p207 = por %p205, %p206
      %p209 = scmp.ne.s32.totalorder %s192, %s208
      %p210 = scmp.eq.s32.totalorder %s34, 0
      %p211 = por %p209, %p210
      %s212 = ssub.s32 %s35, %s47
      %s213 = ssub.s32 %s36, %s43
      %s214 = sor.u32 %s212, %s213
      %p215 = scmp.eq.s32.totalorder %s214, 0
      %s217 = sadd.s32 %s216, 1
      %s218 = scalar_select %p215, %s216, %s217
      %p221 = pneg %p215
      %p222 = scmp.eq.s32.totalorder %s28, 1
      %p223 = por %p221, %p222
      %p224 = scmp.ne.s32.totalorder %s216, %s219
      %p225 = scmp.eq.s32.totalorder %s28, 0
      %p226 = por %p224, %p225
      %p227 = scmp.ne.s32.totalorder %s216, %s219
      %p228 = scmp.eq.s32.totalorder %s33, 1
      %p229 = por %p227, %p228
      %p230 = scmp.ne.s32.totalorder %s219, %s220
      %p231 = scmp.eq.s32.totalorder %s33, 0
      %p232 = por %p230, %p231
      %p233 = scmp.ne.s32.totalorder %s219, %s220
      %p234 = scmp.eq.s32.totalorder %s34, 1
      %p235 = por %p233, %p234
      %p237 = scmp.ne.s32.totalorder %s220, %s236
      %p238 = scmp.eq.s32.totalorder %s34, 0
      %p239 = por %p237, %p238
      %p240 = scmp.le.s32.totalorder 1, %s28
      %p241 = scmp.lt.s32.totalorder %s28, 3
      %p242 = pnand %p240, %p241
      %p243 = pneg %p242
      // Predicated region
      $region9: #{tpu_custom_call.1} parent=5 // pred_check
        _
      $region10: #{tpu_custom_call.1} parent=5 // pred_check_branch
        %245 = sbr.rel (%p242) target = $region12
      $region11: #{tpu_custom_call.1} parent=5 // pred_region
        %s246 = ssub.s32 %s28, 1
        // Predicated region
        $region13: #{tpu_custom_call.1} parent=11 // pred_check
          %p247 = pneg %p113
        $region14: #{tpu_custom_call.1} parent=11 // pred_check_branch
          %249 = sbr.rel (%p247) target = $region16
        $region15: #{tpu_custom_call.1} parent=11 // pred_region
          %251 = vsyncadd [#allocation8], 0
          %s252 = sshll.u32 %s2, 4
          %s253 = int_to_ptr.hbm [resolvable:$true] %s252
          %s254 = sshll.u32 [#allocation9], 4
          %s255 = int_to_ptr.vmem [resolvable:$true] %s254
          %260 = dma.hbm_to_vmem [thread:$0]  %s253, 256, %s255, [#allocation8], 128, 128, 8
        $region16: #{tpu_custom_call.1} parent=11 // pred_fallthru
          _
        // Predicated region
        $region17: #{tpu_custom_call.1} parent=11 // pred_check
          %p261 = pneg %p134
        $region18: #{tpu_custom_call.1} parent=11 // pred_check_branch
          %263 = sbr.rel (%p261) target = $region20
        $region19: #{tpu_custom_call.1} parent=11 // pred_region
          %265 = vsyncadd [#allocation11], 0
          %s266 = sshll.u32 %s3, 4
          %s267 = int_to_ptr.hbm [resolvable:$true] %s266
          %s268 = sshll.u32 [#allocation10], 4
          %s269 = int_to_ptr.vmem [resolvable:$true] %s268
          %274 = dma.hbm_to_vmem [thread:$0]  %s267, 256, %s269, [#allocation11], 128, 128, 8
        $region20: #{tpu_custom_call.1} parent=11 // pred_fallthru
          _
        // Predicated region
        $region21: #{tpu_custom_call.1} parent=11 // pred_check
          %p275 = pneg %p155
        $region22: #{tpu_custom_call.1} parent=11 // pred_check_branch
          %277 = sbr.rel (%p275) target = $region24
        $region23: #{tpu_custom_call.1} parent=11 // pred_region
          %279 = vsyncadd [#allocation11], 0
          %s280 = sshll.u32 %s4, 4
          %s281 = int_to_ptr.hbm [resolvable:$true] %s280
          %s282 = sshll.u32 [#allocation12], 4
          %s283 = int_to_ptr.vmem [resolvable:$true] %s282
          %288 = dma.hbm_to_vmem [thread:$0]  %s281, 256, %s283, [#allocation11], 128, 128, 8
        $region24: #{tpu_custom_call.1} parent=11 // pred_fallthru
          _
        // Predicated region
        $region25: #{tpu_custom_call.1} parent=11 // pred_check
          %p289 = pneg %p176
        $region26: #{tpu_custom_call.1} parent=11 // pred_check_branch
          %291 = sbr.rel (%p289) target = $region28
        $region27: #{tpu_custom_call.1} parent=11 // pred_region
          %293 = vsyncadd [#allocation14], 0
          %s294 = sshll.u32 %s5, 4
          %s295 = int_to_ptr.hbm [resolvable:$true] %s294
          %s296 = sshll.u32 [#allocation13], 4
          %s297 = int_to_ptr.vmem [resolvable:$true] %s296
          %302 = dma.hbm_to_vmem [thread:$0]  %s295, 256, %s297, [#allocation14], 128, 128, 8
        $region28: #{tpu_custom_call.1} parent=11 // pred_fallthru
          _
      $region12: #{tpu_custom_call.1} parent=5 // pred_fallthru
        _
      %p303 = scmp.lt.s32.totalorder %s28, 2
      // Predicated region
      $region29: #{tpu_custom_call.1} parent=5 // pred_check
        %p304 = pneg %p303
      $region30: #{tpu_custom_call.1} parent=5 // pred_check_branch
        %306 = sbr.rel (%p304) target = $region32
      $region31: #{tpu_custom_call.1} parent=5 // pred_region
        // Predicated region
        $region33: #{tpu_custom_call.1} parent=31 // pred_check
          %p307 = pneg %p60
        $region34: #{tpu_custom_call.1} parent=31 // pred_check_branch
          %309 = sbr.rel (%p307) target = $region36
        $region35: #{tpu_custom_call.1} parent=31 // pred_region
          %s310 = sand.u32 %s50, 1
          %s311 = scalar_lea.sflag [#allocation5], %s310
          %s312 = sand.u32 %s50, 1
          %s313 = smul.addr %s312, 8
          %s314 = scalar_lea.vmem [#allocation4], %s313
          %316 = vsyncadd %s311, 0
          %s317 = smul.addr %s35, 8
          %s318 = scalar_lea.hbm %s0, %s317
          %s320 = sshll.u32 %s318, 4
          %s321 = int_to_ptr.hbm [resolvable:$true] %s320
          %s322 = sshll.u32 %s314, 4
          %s323 = int_to_ptr.vmem [resolvable:$true] %s322
          %325 = dma.hbm_to_vmem [thread:$0]  %s321, 128, %s323, %s311
        $region36: #{tpu_custom_call.1} parent=31 // pred_fallthru
          _
        // Predicated region
        $region37: #{tpu_custom_call.1} parent=31 // pred_check
          %p326 = pneg %p86
        $region38: #{tpu_custom_call.1} parent=31 // pred_check_branch
          %328 = sbr.rel (%p326) target = $region40
        $region39: #{tpu_custom_call.1} parent=31 // pred_region
          %s329 = sand.u32 %s28, 1
          %s330 = scalar_lea.sflag [#allocation8], %s329
          %s331 = sand.u32 %s76, 1
          %s332 = smul.addr %s331, 8
          %s333 = scalar_lea.vmem [#allocation7], %s332
          %335 = vsyncadd %s330, 0
          %s336 = smul.addr %s35, 8
          %s337 = scalar_lea.hbm %s1, %s336
          %s339 = sshll.u32 %s337, 4
          %s340 = int_to_ptr.hbm [resolvable:$true] %s339
          %s341 = sshll.u32 %s333, 4
          %s342 = int_to_ptr.vmem [resolvable:$true] %s341
          %344 = dma.hbm_to_vmem [thread:$0]  %s340, 128, %s342, %s330
        $region40: #{tpu_custom_call.1} parent=31 // pred_fallthru
          _
      $region32: #{tpu_custom_call.1} parent=5 // pred_fallthru
        _
      %p345 = scmp.le.s32.totalorder 1, %s28
      %p346 = scmp.lt.s32.totalorder %s28, 3
      %p347 = pnand %p345, %p346
      %p348 = pneg %p347
      // Predicated region
      $region41: #{tpu_custom_call.1} parent=5 // pred_check
        _
      $region42: #{tpu_custom_call.1} parent=5 // pred_check_branch
        %350 = sbr.rel (%p347) target = $region44
      $region43: #{tpu_custom_call.1} parent=5 // pred_region
        %s351 = ssub.s32 %s28, 1
        %s352 = sand.u32 %s53, 1
        %s353 = scalar_lea.sflag [#allocation5], %s352
        %s354 = sand.u32 %s53, 1
        %s355 = smul.addr %s354, 8
        %s356 = scalar_lea.vmem [#allocation4], %s355
        // Predicated region
        $region45: #{tpu_custom_call.1} parent=43 // pred_check
          %p357 = pneg %p66
        $region46: #{tpu_custom_call.1} parent=43 // pred_check_branch
          %359 = sbr.rel (%p357) target = $region48
        $region47: #{tpu_custom_call.1} parent=43 // pred_region
          %361 = dma.done %s353, 128
        $region48: #{tpu_custom_call.1} parent=43 // pred_fallthru
          _
        %s362 = sand.u32 %s33, 1
        %s363 = scalar_lea.sflag [#allocation8], %s362
        %s364 = sand.u32 %s79, 1
        %s365 = smul.addr %s364, 8
        %s366 = scalar_lea.vmem [#allocation7], %s365
        // Predicated region
        $region49: #{tpu_custom_call.1} parent=43 // pred_check
          %p367 = pneg %p92
        $region50: #{tpu_custom_call.1} parent=43 // pred_check_branch
          %369 = sbr.rel (%p367) target = $region52
        $region51: #{tpu_custom_call.1} parent=43 // pred_region
          %371 = dma.done %s363, 128
        $region52: #{tpu_custom_call.1} parent=43 // pred_fallthru
          _
        // Predicated region
        $region53: #{tpu_custom_call.1} parent=43 // pred_check
          %p372 = pneg %p113
        $region54: #{tpu_custom_call.1} parent=43 // pred_check_branch
          %374 = sbr.rel (%p372) target = $region56
        $region55: #{tpu_custom_call.1} parent=43 // pred_region
          %376 = dma.done [#allocation8], 256
        $region56: #{tpu_custom_call.1} parent=43 // pred_fallthru
          _
        // Predicated region
        $region57: #{tpu_custom_call.1} parent=43 // pred_check
          %p377 = pneg %p134
        $region58: #{tpu_custom_call.1} parent=43 // pred_check_branch
          %379 = sbr.rel (%p377) target = $region60
        $region59: #{tpu_custom_call.1} parent=43 // pred_region
          %381 = dma.done [#allocation11], 256
        $region60: #{tpu_custom_call.1} parent=43 // pred_fallthru
          _
        // Predicated region
        $region61: #{tpu_custom_call.1} parent=43 // pred_check
          %p382 = pneg %p155
        $region62: #{tpu_custom_call.1} parent=43 // pred_check_branch
          %384 = sbr.rel (%p382) target = $region64
        $region63: #{tpu_custom_call.1} parent=43 // pred_region
          %386 = dma.done [#allocation11], 256
        $region64: #{tpu_custom_call.1} parent=43 // pred_fallthru
          _
        // Predicated region
        $region65: #{tpu_custom_call.1} parent=43 // pred_check
          %p387 = pneg %p176
        $region66: #{tpu_custom_call.1} parent=43 // pred_check_branch
          %389 = sbr.rel (%p387) target = $region68
        $region67: #{tpu_custom_call.1} parent=43 // pred_region
          %391 = dma.done [#allocation14], 256
        $region68: #{tpu_custom_call.1} parent=43 // pred_fallthru
          _
        %s392 = sand.u32 %s53, 1
        %s393 = scalar_lea.sflag [#allocation5], %s392
        %s394 = sand.u32 %s53, 1
        %s395 = smul.addr %s394, 8
        %s396 = scalar_lea.vmem [#allocation4], %s395
        %p397 = pneg %p66
        %p398 = pneg %p63
        %s399 = sand.u32 %s33, 1
        %s400 = scalar_lea.sflag [#allocation8], %s399
        %s401 = sand.u32 %s79, 1
        %s402 = smul.addr %s401, 8
        %s403 = scalar_lea.vmem [#allocation7], %s402
        %p404 = pneg %p92
        %p405 = pneg %p89
        %p406 = pneg %p113
        %p407 = pneg %p110
        %p408 = pneg %p134
        %p409 = pneg %p131
        %p410 = pneg %p155
        %p411 = pneg %p152
        %p412 = pneg %p176
        %p413 = pneg %p173
        %p414 = pneg %p204
        %p415 = pneg %p201
        %s416 = sand.u32 %s191, 1
        %s417 = scalar_lea.sflag [#allocation6], %s416
        %s418 = sand.u32 %s191, 1
        %s419 = smul.addr %s418, 8
        %s420 = scalar_lea.vmem [#allocation15], %s419
        %p421 = pneg %p232
        %p422 = pneg %p229
        %s423 = sand.u32 %s219, 1
        %s424 = scalar_lea.sflag [#allocation17], %s423
        %s425 = sand.u32 %s219, 1
        %s426 = smul.addr %s425, 8
        %s427 = scalar_lea.vmem [#allocation16], %s426
        %p428 = scmp.eq.s32.totalorder %s38, 0
        // Predicated region
        $region69: #{tpu_custom_call.1} parent=43 // pred_check
          %p429 = pneg %p428
        $region70: #{tpu_custom_call.1} parent=43 // pred_check_branch
          %431 = sbr.rel (%p429) target = $region72
        $region71: #{tpu_custom_call.1} parent=43 // pred_region
          %v432 = vld [vmem:[%s356] sm:$0xff]
          %v433 = vld [vmem:[%s366] sm:$0xff]
          %v434 = vld [vmem:[#allocation9] sm:$0xff]
          %v435 = vld [vmem:[#allocation9 + $0x8] sm:$0xff]
          %v436 = vld [vmem:[#allocation10] sm:$0xff]
          %v437 = vld [vmem:[#allocation10 + $0x8] sm:$0xff]
          %vm438 = vcmask 130048
          %v440 = vsel %vm438, %v433, 0
          %442 = vmatpush.msra.mxu0 0.0
          %443 = vmatpush.msra.mxu0 0.0
          %444 = vmatpush.msra.mxu0 0.0
          %445 = vmatpush.msra.mxu0 0.0
          %446 = vmatpush.msra.mxu0 0.0
          %447 = vmatpush.msra.mxu0 0.0
          %448 = vmatpush.msra.mxu0 0.0
          %449 = vmatpush.msra.mxu0 0.0
          %450 = vmatpush.msra.mxu0 0.0
          %451 = vmatpush.msra.mxu0 0.0
          %452 = vmatpush.msra.mxu0 0.0
          %453 = vmatpush.msra.mxu0 0.0
          %454 = vmatpush.msra.mxu0 0.0
          %455 = vmatpush.msra.mxu0 0.0
          %456 = vmatpush.msra.mxu0 %v437
          %457 = vmatpush.msra.mxu0 %v436
          %458 = vmatmul.f32.gmra.mxu0 %v440
          %v459 = vpop.f32.mrf.mxu0
          %v460 = vadd.f32 0.0, %v459
          %461 = vdwg.mxu0
          %v463 = vsel %vm438, %v432, 0
          %465 = vmatpush.msra.mxu0 0.0
          %466 = vmatpush.msra.mxu0 0.0
          %467 = vmatpush.msra.mxu0 0.0
          %468 = vmatpush.msra.mxu0 0.0
          %469 = vmatpush.msra.mxu0 0.0
          %470 = vmatpush.msra.mxu0 0.0
          %471 = vmatpush.msra.mxu0 0.0
          %472 = vmatpush.msra.mxu0 0.0
          %473 = vmatpush.msra.mxu0 0.0
          %474 = vmatpush.msra.mxu0 0.0
          %475 = vmatpush.msra.mxu0 0.0
          %476 = vmatpush.msra.mxu0 0.0
          %477 = vmatpush.msra.mxu0 0.0
          %478 = vmatpush.msra.mxu0 0.0
          %479 = vmatpush.msra.mxu0 %v435
          %480 = vmatpush.msra.mxu0 %v434
          %481 = vmatmul.f32.gmra.mxu0 %v463
          %v482 = vpop.f32.mrf.mxu0
          %v483 = vadd.f32 %v460, %v482
          %484 = vdwg.mxu0
          %v485 = vld [vmem:[#allocation12] sm:$0xff]
          %v486 = vld [vmem:[#allocation12 + $0x8] sm:$0xff]
          %v487 = vld [vmem:[#allocation13] sm:$0xff]
          %v488 = vld [vmem:[#allocation13 + $0x8] sm:$0xff]
          %489 = vmatpush.msra.mxu0 0.0
          %490 = vmatpush.msra.mxu0 0.0
          %491 = vmatpush.msra.mxu0 0.0
          %492 = vmatpush.msra.mxu0 0.0
          %493 = vmatpush.msra.mxu0 0.0
          %494 = vmatpush.msra.mxu0 0.0
          %495 = vmatpush.msra.mxu0 0.0
          %496 = vmatpush.msra.mxu0 0.0
          %497 = vmatpush.msra.mxu0 0.0
          %498 = vmatpush.msra.mxu0 0.0
          %499 = vmatpush.msra.mxu0 0.0
          %500 = vmatpush.msra.mxu0 0.0
          %501 = vmatpush.msra.mxu0 0.0
          %502 = vmatpush.msra.mxu0 0.0
          %503 = vmatpush.msra.mxu0 %v488
          %504 = vmatpush.msra.mxu0 %v487
          %505 = vmatmul.f32.gmra.mxu0 %v440
          %v506 = vpop.f32.mrf.mxu0
          %v507 = vadd.f32 0.0, %v506
          %508 = vdwg.mxu0
          %509 = vmatpush.msra.mxu0 0.0
          %510 = vmatpush.msra.mxu0 0.0
          %511 = vmatpush.msra.mxu0 0.0
          %512 = vmatpush.msra.mxu0 0.0
          %513 = vmatpush.msra.mxu0 0.0
          %514 = vmatpush.msra.mxu0 0.0
          %515 = vmatpush.msra.mxu0 0.0
          %516 = vmatpush.msra.mxu0 0.0
          %517 = vmatpush.msra.mxu0 0.0
          %518 = vmatpush.msra.mxu0 0.0
          %519 = vmatpush.msra.mxu0 0.0
          %520 = vmatpush.msra.mxu0 0.0
          %521 = vmatpush.msra.mxu0 0.0
          %522 = vmatpush.msra.mxu0 0.0
          %523 = vmatpush.msra.mxu0 %v486
          %524 = vmatpush.msra.mxu0 %v485
          %525 = vmatmul.f32.gmra.mxu0 %v463
          %v526 = vpop.f32.mrf.mxu0
          %v527 = vadd.f32 %v507, %v526
          %528 = vdwg.mxu0
          %vm529 = vcmask 261120
          %530 = vst.msk [vmem:[#allocation2] sm:$0xff] %vm529, %v483
          %531 = vst.msk [vmem:[#allocation3] sm:$0xff] %vm529, %v527
        $region72: #{tpu_custom_call.1} parent=43 // pred_fallthru
          _
        %s532 = smul.u32 %s38, 8
        %s533 = scalar_lea.vmem [#allocation2], %s532
        %v534 = vld [vmem:[%s533] sm:$0xff]
        %v535 = vld [vmem:[#allocation3] sm:$0xff]
        %vm536 = vcmask 261120
        %v538 = vsel %vm536, %v534, 0
        %v541 = vsel %vm536, %v535, 0
        %543 = vmatpush.xpose.msra.mxu0 0.0
        %544 = vmatpush.xpose.msra.mxu0 0.0
        %545 = vmatpush.xpose.msra.mxu0 0.0
        %546 = vmatpush.xpose.msra.mxu0 0.0
        %547 = vmatpush.xpose.msra.mxu0 0.0
        %548 = vmatpush.xpose.msra.mxu0 0.0
        %549 = vmatpush.xpose.msra.mxu0 0.0
        %550 = vmatpush.xpose.msra.mxu0 0.0
        %551 = vmatpush.xpose.msra.mxu0 0.0
        %552 = vmatpush.xpose.msra.mxu0 0.0
        %553 = vmatpush.xpose.msra.mxu0 0.0
        %554 = vmatpush.xpose.msra.mxu0 0.0
        %555 = vmatpush.xpose.msra.mxu0 0.0
        %556 = vmatpush.xpose.msra.mxu0 0.0
        %557 = vmatpush.xpose.msra.mxu0 0.0
        %558 = vmatpush.xpose.msra.mxu0 %v541
        %559 = vmatmul.f32.gmra.mxu0 %v538
        %v560 = vpop.f32.mrf.mxu0
        %v561 = vadd.f32 0.0, %v560
        %562 = vdwg.mxu0
        %v563 = vld [vmem:[%s356] sm:$0xff]
        %s564 = scalar_lea.vmem %s356, %s532 [#allocation4]
        %v565 = vld [vmem:[%s564] sm:$0xff]
        %vm566 = vcmask 64512
        %v568 = vsel %vm566, %v561, 0
        %570 = vmatpush.msra.mxu0 0.0
        %571 = vmatpush.msra.mxu0 0.0
        %572 = vmatpush.msra.mxu0 0.0
        %573 = vmatpush.msra.mxu0 0.0
        %574 = vmatpush.msra.mxu0 0.0
        %575 = vmatpush.msra.mxu0 0.0
        %576 = vmatpush.msra.mxu0 0.0
        %577 = vmatpush.msra.mxu0 0.0
        %578 = vmatpush.msra.mxu0 0.0
        %579 = vmatpush.msra.mxu0 0.0
        %580 = vmatpush.msra.mxu0 0.0
        %581 = vmatpush.msra.mxu0 0.0
        %582 = vmatpush.msra.mxu0 0.0
        %583 = vmatpush.msra.mxu0 0.0
        %584 = vmatpush.msra.mxu0 0.0
        %585 = vmatpush.msra.mxu0 %v563
        %586 = vmatmul.f32.gmra.mxu0 %v568
        %v587 = vpop.f32.mrf.mxu0
        %v588 = vadd.f32 %v565, %v587
        %589 = vdwg.mxu0
        %vm590 = vcmask 130048
        %591 = vst.msk [vmem:[%s420] sm:$0xff] %vm590, %v588
        %592 = vst.msk [vmem:[%s427] sm:$0xff] %vm566, %v561
        %s593 = sand.u32 %s191, 1
        %s594 = scalar_lea.sflag [#allocation6], %s593
        %s595 = sand.u32 %s191, 1
        %s596 = smul.addr %s595, 8
        %s597 = scalar_lea.vmem [#allocation15], %s596
        %s598 = sand.u32 %s219, 1
        %s599 = scalar_lea.sflag [#allocation17], %s598
        %s600 = sand.u32 %s219, 1
        %s601 = smul.addr %s600, 8
        %s602 = scalar_lea.vmem [#allocation16], %s601
        // Predicated region
        $region73: #{tpu_custom_call.1} parent=43 // pred_check
          %p603 = pneg %p201
        $region74: #{tpu_custom_call.1} parent=43 // pred_check_branch
          %605 = sbr.rel (%p603) target = $region76
        $region75: #{tpu_custom_call.1} parent=43 // pred_region
          %607 = vsyncadd %s594, 0
          %s608 = sadd.s32 %s38, %s37
          %s609 = smul.addr %s608, 8
          %s610 = scalar_lea.hbm %s6, %s609
          %s612 = sshll.u32 %s597, 4
          %s613 = int_to_ptr.vmem [resolvable:$true] %s612
          %s614 = sshll.u32 %s610, 4
          %s615 = int_to_ptr.hbm [resolvable:$true] %s614
          %617 = dma.vmem_to_hbm [thread:$0]  %s613, 128, %s615, %s594
        $region76: #{tpu_custom_call.1} parent=43 // pred_fallthru
          _
        // Predicated region
        $region77: #{tpu_custom_call.1} parent=43 // pred_check
          %p618 = pneg %p229
        $region78: #{tpu_custom_call.1} parent=43 // pred_check_branch
          %620 = sbr.rel (%p618) target = $region80
        $region79: #{tpu_custom_call.1} parent=43 // pred_region
          %622 = vsyncadd %s599, 0
          %s623 = sadd.s32 %s38, %s37
          %s624 = smul.addr %s623, 8
          %s625 = scalar_lea.hbm %s7, %s624
          %s627 = sshll.u32 %s602, 4
          %s628 = int_to_ptr.vmem [resolvable:$true] %s627
          %s629 = sshll.u32 %s625, 4
          %s630 = int_to_ptr.hbm [resolvable:$true] %s629
          %632 = dma.vmem_to_hbm [thread:$0]  %s628, 128, %s630, %s599
        $region80: #{tpu_custom_call.1} parent=43 // pred_fallthru
          _
      $region44: #{tpu_custom_call.1} parent=5 // pred_fallthru
        _
      %p633 = scmp.le.s32.totalorder 2, %s28
      // Predicated region
      $region81: #{tpu_custom_call.1} parent=5 // pred_check
        %p634 = pneg %p633
      $region82: #{tpu_custom_call.1} parent=5 // pred_check_branch
        %636 = sbr.rel (%p634) target = $region84
      $region83: #{tpu_custom_call.1} parent=5 // pred_region
        %s637 = ssub.s32 %s28, 2
        // Predicated region
        $region85: #{tpu_custom_call.1} parent=83 // pred_check
          %p638 = pneg %p207
        $region86: #{tpu_custom_call.1} parent=83 // pred_check_branch
          %640 = sbr.rel (%p638) target = $region88
        $region87: #{tpu_custom_call.1} parent=83 // pred_region
          %s641 = sand.u32 %s192, 1
          %s642 = scalar_lea.sflag [#allocation6], %s641
          %s643 = sand.u32 %s192, 1
          %s644 = smul.addr %s643, 8
          %s645 = scalar_lea.vmem [#allocation15], %s644
          %647 = dma.done %s642, 128
        $region88: #{tpu_custom_call.1} parent=83 // pred_fallthru
          _
        // Predicated region
        $region89: #{tpu_custom_call.1} parent=83 // pred_check
          %p648 = pneg %p235
        $region90: #{tpu_custom_call.1} parent=83 // pred_check_branch
          %650 = sbr.rel (%p648) target = $region92
        $region91: #{tpu_custom_call.1} parent=83 // pred_region
          %s651 = sand.u32 %s220, 1
          %s652 = scalar_lea.sflag [#allocation17], %s651
          %s653 = sand.u32 %s220, 1
          %s654 = smul.addr %s653, 8
          %s655 = scalar_lea.vmem [#allocation16], %s654
          %657 = dma.done %s652, 128
        $region92: #{tpu_custom_call.1} parent=83 // pred_fallthru
          _
      $region84: #{tpu_custom_call.1} parent=5 // pred_fallthru
        _
    $region6: #{tpu_custom_call.1} parent=1 // loop_footer
      %s32 = sadd.s32 1, %s28
    $region7: #{tpu_custom_call.1} parent=1 // loop_footer_branch
      %27 = sbr.rel target = $region3
    $region8: #{tpu_custom_call.1} parent=1 // loop_exit
      _
    %658 = vsyncpa [#allocation5], 1
    %s659 = scalar_lea.sflag [#allocation5], 1
    %660 = vsyncpa %s659, 1
    %661 = vsyncpa [#allocation8], 1
    %s662 = scalar_lea.sflag [#allocation8], 1
    %663 = vsyncpa %s662, 1
    %664 = vsyncpa [#allocation11], 1
    %665 = vsyncpa [#allocation14], 1
    %666 = vsyncpa [#allocation6], 1
    %s667 = scalar_lea.sflag [#allocation6], 1
    %668 = vsyncpa %s667, 1
    %669 = vsyncpa [#allocation17], 1
    %s670 = scalar_lea.sflag [#allocation17], 1
    %671 = vsyncpa %s670, 1

</llo_original>
